<compile_context>
chip_gen: v7x
topology: tpu7x:2x2x1
jax: 0.10.0
libtpu: 0.0.40
codegen_flags: <defaults>
</compile_context>

<pallas_src>
import functools

import jax
import jax.numpy as jnp
import numpy as np
from jax import lax
from jax.experimental import pallas as pl
from jax.experimental.pallas import tpu as pltpu  # noqa: F401  (TPU backend)

KSIZE = 3
PAD = 1
EPS = 1e-5
LANES = 128
# TODO(synk): only the module's default stride=1 / padding=1 path is implemented.


def _bn_relu(t, gamma_p, beta_p, chan_p, C, inv_n):
    """Training-mode BatchNorm + ReLU on a (rows, W*C) lane-packed tensor.

    One fused sum / sum-of-squares pass over rows, then:
      * group-reduce over the W lane groups:  (2, WC) x sel^T -> (2, C)
      * broadcast mean / E[x^2] back to lanes: (2, C) x sel   -> (2, WC)
    Both are tiny MXU matmuls against a 0/1 selector built from an iota
    comparison (review item: removes the serialized per-lane-group VPU loops).
    gamma_p / beta_p / chan_p arrive pre-tiled over W with shape (1, W*C).
    """
    f32 = jnp.float32
    WC = t.shape[1]
    # sel[c, l] = 1 iff packed lane l carries channel c (no DMA, no modulo).
    row_c = lax.broadcasted_iota(jnp.int32, (C, WC), 0)
    sel = (row_c == chan_p.astype(jnp.int32)).astype(f32)             # (C, WC)

    s = jnp.concatenate([jnp.sum(t, axis=0, keepdims=True),
                         jnp.sum(t * t, axis=0, keepdims=True)], axis=0)  # (2, WC)
    cs = lax.dot_general(s, sel, (((1,), (1,)), ((), ())),
                         preferred_element_type=f32) * inv_n           # (2, C)
    mv = jnp.dot(cs, sel, preferred_element_type=f32)                  # (2, WC)
    mean_p = mv[0:1]
    var_p = mv[1:2] - mean_p * mean_p           # biased batch variance
    # TODO(synk): E[x^2]-E[x]^2 can cancel for large-mean activations; switch
    # to a centered two-pass formulation if that regime matters.
    a_p = gamma_p * lax.rsqrt(var_p + EPS)      # per-lane scale
    b_p = beta_p - mean_p * a_p                 # per-lane shift
    return jnp.maximum(t * a_p + b_p, 0.0)


def _dsb_kernel(xp_ref, dww_ref, p1_ref, wbd_ref, p2_ref, out_ref,
                *, B, H, W, Cin, Cout):
    f32 = jnp.float32
    WCi, WCo = W * Cin, W * Cout
    inv_n = 1.0 / float(B * H * W)              # BatchNorm sample count

    xp = xp_ref[...].astype(f32)                # (B, H+2, minor_pad), halo + lane pad
    w9 = dww_ref[...].astype(f32)               # (9, WCi): per-tap weights tiled over W
    p1 = p1_ref[...]                            # (4, WCi): [dw bias, g1, b1, chan ids]
    p2 = p2_ref[...]                            # (4, WCo): [pw bias, g2, b2, chan ids]

    # ---- depthwise 3x3 conv (stride 1): 9 unrolled lane-dense taps (VPU) ----
    # A shift along W moves by a whole Cin-sized lane group, so every tap is a
    # contiguous (B, H, W*Cin) window of the padded block.
    acc = jnp.zeros((B, H, WCi), f32)
    for kh in range(KSIZE):
        for kw in range(KSIZE):
            tap = xp[:, kh:kh + H, kw * Cin:kw * Cin + WCi]
            acc = acc + tap * w9[kh * KSIZE + kw]
    y = acc.reshape(B * H, WCi) + p1[0:1]       # + depthwise bias (tiled over W)

    # ---- BatchNorm2d #1 (batch stats, selector-matmul epilogue) + ReLU ------
    y = _bn_relu(y, p1[1:2], p1[2:3], p1[3:4], Cin, inv_n)

    # ---- 1x1 conv: block-diagonal (WCi, WCo) MXU matmul, bf16 ops, f32 acc --
    z = jnp.dot(y.astype(wbd_ref.dtype), wbd_ref[...],
                preferred_element_type=f32) + p2[0:1]

    # ---- BatchNorm2d #2 (batch stats, selector-matmul epilogue) + ReLU ------
    z = _bn_relu(z, p2[1:2], p2[2:3], p2[3:4], Cout, inv_n)

    # lane-dense (B*H, W*Cout) store: minor dim is a multiple of 128.
    out_ref[...] = z.astype(out_ref.dtype)


def depthwise_separable_block(x_nchw, dw_w, dw_b, g1, b1, pw_w, pw_b, g2, b2):
    """x_nchw: (B, Cin, H, W). Returns (B, Cout, H, W)."""
    B, Cin, H, W = x_nchw.shape
    Cout = pw_w.shape[0]
    WCi, WCo = W * Cin, W * Cout
    f32 = jnp.float32

    # ---- glue (plain XLA): layout packing + parameter preprocessing --------
    # NCHW -> NHWC -> 1-pixel zero halo -> pack (w, c) onto the lane axis,
    # then pad the packed minor dim up to a multiple of 128 so row loads and
    # all 9 tap windows are unmasked full lane tiles (review item #3).
    x = jnp.transpose(x_nchw, (0, 2, 3, 1))
    xp = jnp.pad(x, ((0, 0), (PAD, PAD), (PAD, PAD), (0, 0)))
    xp = xp.reshape(B, H + 2 * PAD, (W + 2 * PAD) * Cin)
    minor = (W + 2 * PAD) * Cin
    minor_pad = ((minor + LANES - 1) // LANES) * LANES
    xp = jnp.pad(xp, ((0, 0), (0, 0), (0, minor_pad - minor)))
    # TODO(synk): for large feature maps, stage the halo in VMEM inside the
    # kernel instead of materialising a padded copy in HBM.

    # depthwise weights tiled over W so each tap broadcasts over packed lanes
    dww = jnp.transpose(dw_w[:, 0], (1, 2, 0)).astype(f32)            # (3,3,Cin)
    dww_t = jnp.tile(dww[:, :, None, :], (1, 1, W, 1)).reshape(KSIZE * KSIZE, WCi)

    # 1x1 conv as a block-diagonal (WCi, WCo) matrix in bf16 (native MXU rate,
    # half the weight DMA/VMEM); accumulation stays f32 (review item #4).
    pww = jnp.transpose(pw_w[:, :, 0, 0], (1, 0)).astype(f32)         # (Cin, Cout)
    wbd = jnp.kron(jnp.eye(W, dtype=f32), pww).astype(jnp.bfloat16)
    # TODO(synk): for large W cap the packing group at G = 128 // Cin lanes (or
    # fall back to a plain (Cin, Cout) GEMM over B*H*W rows) so this weight
    # does not grow as W^2 and collide with v7x's 64 MiB VMEM.

    # All tiny per-channel vectors (biases, BN affine params, packed-lane
    # channel ids) tiled over W and packed into two lane-dense arrays so the
    # kernel takes 5 input DMAs instead of 11 (review item #2).
    def tile_w(v):
        return jnp.tile(v.astype(f32), W)[None, :]
    p1 = jnp.concatenate([tile_w(dw_b), tile_w(g1), tile_w(b1),
                          tile_w(jnp.arange(Cin, dtype=f32))], axis=0)   # (4, WCi)
    p2 = jnp.concatenate([tile_w(pw_b), tile_w(g2), tile_w(b2),
                          tile_w(jnp.arange(Cout, dtype=f32))], axis=0)  # (4, WCo)

    def full(shape):
        nd = len(shape)
        return pl.BlockSpec(shape, lambda i, _nd=nd: (0,) * _nd)

    kernel = functools.partial(_dsb_kernel, B=B, H=H, W=W, Cin=Cin, Cout=Cout)
    out2d = pl.pallas_call(
        kernel,
        out_shape=jax.ShapeDtypeStruct((B * H, WCo), x_nchw.dtype),
        grid=(1,),
        in_specs=[full(xp.shape), full(dww_t.shape), full(p1.shape),
                  full(wbd.shape), full(p2.shape)],
        out_specs=full((B * H, WCo)),
        # TODO(synk): for production-sized feature maps, tile the grid over row
        # blocks with a two-pass BN (stat accumulators in VMEM scratch, stats
        # axis last / "arbitrary"), mark the row axis "parallel" so v7x's two
        # TensorCores split it, use pipeline_mode=pl.Buffered(2-3) on the
        # activation specs, and set vmem_limit_bytes for the 64 MiB v7x budget.
        # A single resident block is fine at this toy shape and keeps
        # training-mode BN statistics global in one pass.
    )(xp, dww_t, p1, wbd, p2)

    # unpack: (B*H, W*Cout) -> (B, H, W, Cout) -> NCHW (cheap XLA reshapes)
    return jnp.transpose(out2d.reshape(B, H, W, Cout), (0, 3, 1, 2))


def _reference(x, dw_w, dw_b, g1, b1, pw_w, pw_b, g2, b2):
    """Pure-JAX reference with identical (training-mode BN) semantics."""
    Cin = x.shape[1]

    def bn(t, g, b):
        m = t.mean(axis=(0, 2, 3), keepdims=True)
        v = ((t - m) ** 2).mean(axis=(0, 2, 3), keepdims=True)
        return (t - m) * jax.lax.rsqrt(v + EPS) * g[None, :, None, None] \
            + b[None, :, None, None]

    y = jax.lax.conv_general_dilated(
        x, dw_w, window_strides=(1, 1), padding=((PAD, PAD), (PAD, PAD)),
        feature_group_count=Cin,
        dimension_numbers=("NCHW", "OIHW", "NCHW"))
    y = y + dw_b[None, :, None, None]
    y = jnp.maximum(bn(y, g1, b1), 0.0)

    z = jax.lax.conv_general_dilated(
        y, pw_w, window_strides=(1, 1), padding="VALID",
        dimension_numbers=("NCHW", "OIHW", "NCHW"))
    z = z + pw_b[None, :, None, None]
    z = jnp.maximum(bn(z, g2, b2), 0.0)
    return z


if __name__ == "__main__":
    B, Cin, Cout, H, W = 2, 8, 16, 16, 16

    key = jax.random.PRNGKey(0)
    ks = jax.random.split(key, 9)
    x = jax.random.normal(ks[0], (B, Cin, H, W), jnp.float32)

    # deterministic parameter init (same shapes as the PyTorch module)
    dw_w = 0.1 * jax.random.normal(ks[1], (Cin, 1, KSIZE, KSIZE), jnp.float32)
    dw_b = 0.1 * jax.random.normal(ks[2], (Cin,), jnp.float32)
    g1 = 1.0 + 0.1 * jax.random.normal(ks[3], (Cin,), jnp.float32)
    b1 = 0.1 * jax.random.normal(ks[4], (Cin,), jnp.float32)
    pw_w = 0.1 * jax.random.normal(ks[5], (Cout, Cin, 1, 1), jnp.float32)
    pw_b = 0.1 * jax.random.normal(ks[6], (Cout,), jnp.float32)
    g2 = 1.0 + 0.1 * jax.random.normal(ks[7], (Cout,), jnp.float32)
    b2 = 0.1 * jax.random.normal(ks[8], (Cout,), jnp.float32)

    out = depthwise_separable_block(x, dw_w, dw_b, g1, b1, pw_w, pw_b, g2, b2)
    out = jax.block_until_ready(out)

    ref = _reference(x, dw_w, dw_b, g1, b1, pw_w, pw_b, g2, b2)
    # Tolerance relaxed vs. the f32-only version: the 1x1 conv now uses bf16
    # MXU operands (f32 accumulation), and BN2 rescales by per-channel std.
    np.testing.assert_allclose(np.asarray(out), np.asarray(ref),
                               rtol=2e-2, atol=4e-2)
    print("KERNEL_OK")
</pallas_src>

<mosaic_0001>
module attributes {stable_mosaic.version = 11 : i64} {
  func.func @_dsb_kernel(%arg0: i32, %arg1: memref<2x18x256xf32, #tpu.memory_space<vmem>>, %arg2: memref<9x128xf32, #tpu.memory_space<vmem>>, %arg3: memref<4x128xf32, #tpu.memory_space<vmem>>, %arg4: memref<128x256xbf16, #tpu.memory_space<vmem>>, %arg5: memref<4x256xf32, #tpu.memory_space<vmem>>, %arg6: memref<32x256xf32, #tpu.memory_space<vmem>>) attributes {dimension_semantics = [#tpu.dimension_semantics<arbitrary>], iteration_bounds = array<i64: 1>, scalar_prefetch = 0 : i64, scratch_operands = 0 : i64, tpu.core_type = #tpu.core_type<tc>, window_params = [{pipeline_mode = #tpu.pipeline_mode<synchronous>, transform_indices = @transform_0, window_bounds = array<i64: 2, 18, 256>}, {pipeline_mode = #tpu.pipeline_mode<synchronous>, transform_indices = @transform_1, window_bounds = array<i64: 9, 128>}, {pipeline_mode = #tpu.pipeline_mode<synchronous>, transform_indices = @transform_2, window_bounds = array<i64: 4, 128>}, {pipeline_mode = #tpu.pipeline_mode<synchronous>, transform_indices = @transform_3, window_bounds = array<i64: 128, 256>}, {pipeline_mode = #tpu.pipeline_mode<synchronous>, transform_indices = @transform_4, window_bounds = array<i64: 4, 256>}, {pipeline_mode = #tpu.pipeline_mode<synchronous>, transform_indices = @transform_5, window_bounds = array<i64: 32, 256>}]} {
    %c0 = arith.constant 0 : index
    %c0_0 = arith.constant 0 : index
    %c0_1 = arith.constant 0 : index
    %0 = vector.load %arg1[%c0, %c0_0, %c0_1] : memref<2x18x256xf32, #tpu.memory_space<vmem>>, vector<2x18x256xf32>
    %c0_2 = arith.constant 0 : index
    %c0_3 = arith.constant 0 : index
    %1 = vector.load %arg2[%c0_2, %c0_3] : memref<9x128xf32, #tpu.memory_space<vmem>>, vector<9x128xf32>
    %c0_4 = arith.constant 0 : index
    %c0_5 = arith.constant 0 : index
    %2 = vector.load %arg3[%c0_4, %c0_5] : memref<4x128xf32, #tpu.memory_space<vmem>>, vector<4x128xf32>
    %c0_6 = arith.constant 0 : index
    %c0_7 = arith.constant 0 : index
    %3 = vector.load %arg5[%c0_6, %c0_7] : memref<4x256xf32, #tpu.memory_space<vmem>>, vector<4x256xf32>
    %cst = arith.constant 0.000000e+00 : f32
    %4 = vector.broadcast %cst : f32 to vector<2x16x128xf32>
    %5 = vector.extract_strided_slice %0 {offsets = [0, 0, 0], sizes = [2, 16, 128], strides = [1, 1, 1]} : vector<2x18x256xf32> to vector<2x16x128xf32>
    %6 = vector.extract_strided_slice %1 {offsets = [0, 0], sizes = [1, 128], strides = [1, 1]} : vector<9x128xf32> to vector<1x128xf32>
    %7 = vector.shape_cast %6 : vector<1x128xf32> to vector<128xf32>
    %8 = vector.shape_cast %7 : vector<128xf32> to vector<1x1x128xf32>
    %9 = vector.broadcast %8 : vector<1x1x128xf32> to vector<2x16x128xf32>
    %10 = arith.mulf %5, %9 : vector<2x16x128xf32>
    %11 = arith.addf %4, %10 : vector<2x16x128xf32>
    %12 = vector.extract_strided_slice %0 {offsets = [0, 0, 8], sizes = [2, 16, 128], strides = [1, 1, 1]} : vector<2x18x256xf32> to vector<2x16x128xf32>
    %13 = vector.extract_strided_slice %1 {offsets = [1, 0], sizes = [1, 128], strides = [1, 1]} : vector<9x128xf32> to vector<1x128xf32>
    %14 = vector.shape_cast %13 : vector<1x128xf32> to vector<128xf32>
    %15 = vector.shape_cast %14 : vector<128xf32> to vector<1x1x128xf32>
    %16 = vector.broadcast %15 : vector<1x1x128xf32> to vector<2x16x128xf32>
    %17 = arith.mulf %12, %16 : vector<2x16x128xf32>
    %18 = arith.addf %11, %17 : vector<2x16x128xf32>
    %19 = vector.extract_strided_slice %0 {offsets = [0, 0, 16], sizes = [2, 16, 128], strides = [1, 1, 1]} : vector<2x18x256xf32> to vector<2x16x128xf32>
    %20 = vector.extract_strided_slice %1 {offsets = [2, 0], sizes = [1, 128], strides = [1, 1]} : vector<9x128xf32> to vector<1x128xf32>
    %21 = vector.shape_cast %20 : vector<1x128xf32> to vector<128xf32>
    %22 = vector.shape_cast %21 : vector<128xf32> to vector<1x1x128xf32>
    %23 = vector.broadcast %22 : vector<1x1x128xf32> to vector<2x16x128xf32>
    %24 = arith.mulf %19, %23 : vector<2x16x128xf32>
    %25 = arith.addf %18, %24 : vector<2x16x128xf32>
    %26 = vector.extract_strided_slice %0 {offsets = [0, 1, 0], sizes = [2, 16, 128], strides = [1, 1, 1]} : vector<2x18x256xf32> to vector<2x16x128xf32>
    %27 = vector.extract_strided_slice %1 {offsets = [3, 0], sizes = [1, 128], strides = [1, 1]} : vector<9x128xf32> to vector<1x128xf32>
    %28 = vector.shape_cast %27 : vector<1x128xf32> to vector<128xf32>
    %29 = vector.shape_cast %28 : vector<128xf32> to vector<1x1x128xf32>
    %30 = vector.broadcast %29 : vector<1x1x128xf32> to vector<2x16x128xf32>
    %31 = arith.mulf %26, %30 : vector<2x16x128xf32>
    %32 = arith.addf %25, %31 : vector<2x16x128xf32>
    %33 = vector.extract_strided_slice %0 {offsets = [0, 1, 8], sizes = [2, 16, 128], strides = [1, 1, 1]} : vector<2x18x256xf32> to vector<2x16x128xf32>
    %34 = vector.extract_strided_slice %1 {offsets = [4, 0], sizes = [1, 128], strides = [1, 1]} : vector<9x128xf32> to vector<1x128xf32>
    %35 = vector.shape_cast %34 : vector<1x128xf32> to vector<128xf32>
    %36 = vector.shape_cast %35 : vector<128xf32> to vector<1x1x128xf32>
    %37 = vector.broadcast %36 : vector<1x1x128xf32> to vector<2x16x128xf32>
    %38 = arith.mulf %33, %37 : vector<2x16x128xf32>
    %39 = arith.addf %32, %38 : vector<2x16x128xf32>
    %40 = vector.extract_strided_slice %0 {offsets = [0, 1, 16], sizes = [2, 16, 128], strides = [1, 1, 1]} : vector<2x18x256xf32> to vector<2x16x128xf32>
    %41 = vector.extract_strided_slice %1 {offsets = [5, 0], sizes = [1, 128], strides = [1, 1]} : vector<9x128xf32> to vector<1x128xf32>
    %42 = vector.shape_cast %41 : vector<1x128xf32> to vector<128xf32>
    %43 = vector.shape_cast %42 : vector<128xf32> to vector<1x1x128xf32>
    %44 = vector.broadcast %43 : vector<1x1x128xf32> to vector<2x16x128xf32>
    %45 = arith.mulf %40, %44 : vector<2x16x128xf32>
    %46 = arith.addf %39, %45 : vector<2x16x128xf32>
    %47 = vector.extract_strided_slice %0 {offsets = [0, 2, 0], sizes = [2, 16, 128], strides = [1, 1, 1]} : vector<2x18x256xf32> to vector<2x16x128xf32>
    %48 = vector.extract_strided_slice %1 {offsets = [6, 0], sizes = [1, 128], strides = [1, 1]} : vector<9x128xf32> to vector<1x128xf32>
    %49 = vector.shape_cast %48 : vector<1x128xf32> to vector<128xf32>
    %50 = vector.shape_cast %49 : vector<128xf32> to vector<1x1x128xf32>
    %51 = vector.broadcast %50 : vector<1x1x128xf32> to vector<2x16x128xf32>
    %52 = arith.mulf %47, %51 : vector<2x16x128xf32>
    %53 = arith.addf %46, %52 : vector<2x16x128xf32>
    %54 = vector.extract_strided_slice %0 {offsets = [0, 2, 8], sizes = [2, 16, 128], strides = [1, 1, 1]} : vector<2x18x256xf32> to vector<2x16x128xf32>
    %55 = vector.extract_strided_slice %1 {offsets = [7, 0], sizes = [1, 128], strides = [1, 1]} : vector<9x128xf32> to vector<1x128xf32>
    %56 = vector.shape_cast %55 : vector<1x128xf32> to vector<128xf32>
    %57 = vector.shape_cast %56 : vector<128xf32> to vector<1x1x128xf32>
    %58 = vector.broadcast %57 : vector<1x1x128xf32> to vector<2x16x128xf32>
    %59 = arith.mulf %54, %58 : vector<2x16x128xf32>
    %60 = arith.addf %53, %59 : vector<2x16x128xf32>
    %61 = vector.extract_strided_slice %0 {offsets = [0, 2, 16], sizes = [2, 16, 128], strides = [1, 1, 1]} : vector<2x18x256xf32> to vector<2x16x128xf32>
    %62 = vector.extract_strided_slice %1 {offsets = [8, 0], sizes = [1, 128], strides = [1, 1]} : vector<9x128xf32> to vector<1x128xf32>
    %63 = vector.shape_cast %62 : vector<1x128xf32> to vector<128xf32>
    %64 = vector.shape_cast %63 : vector<128xf32> to vector<1x1x128xf32>
    %65 = vector.broadcast %64 : vector<1x1x128xf32> to vector<2x16x128xf32>
    %66 = arith.mulf %61, %65 : vector<2x16x128xf32>
    %67 = arith.addf %60, %66 : vector<2x16x128xf32>
    %68 = vector.shape_cast %67 : vector<2x16x128xf32> to vector<32x128xf32>
    %69 = vector.extract_strided_slice %2 {offsets = [0, 0], sizes = [1, 128], strides = [1, 1]} : vector<4x128xf32> to vector<1x128xf32>
    %70 = vector.broadcast %69 : vector<1x128xf32> to vector<32x128xf32>
    %71 = arith.addf %68, %70 : vector<32x128xf32>
    %72 = vector.extract_strided_slice %2 {offsets = [1, 0], sizes = [1, 128], strides = [1, 1]} : vector<4x128xf32> to vector<1x128xf32>
    %73 = vector.extract_strided_slice %2 {offsets = [2, 0], sizes = [1, 128], strides = [1, 1]} : vector<4x128xf32> to vector<1x128xf32>
    %74 = vector.extract_strided_slice %2 {offsets = [3, 0], sizes = [1, 128], strides = [1, 1]} : vector<4x128xf32> to vector<1x128xf32>
    %75 = tpu.iota {dimensions = array<i32: 0>} : vector<8x128xi32>
    %76 = arith.fptosi %74 : vector<1x128xf32> to vector<1x128xi32>
    %77 = vector.broadcast %76 : vector<1x128xi32> to vector<8x128xi32>
    %78 = arith.cmpi eq, %75, %77 : vector<8x128xi32>
    %79 = arith.extui %78 : vector<8x128xi1> to vector<8x128xi32>
    %80 = arith.sitofp %79 : vector<8x128xi32> to vector<8x128xf32>
    %cst_8 = arith.constant dense<0.000000e+00> : vector<128xf32>
    %81 = vector.multi_reduction <add>, %71, %cst_8 [0] : vector<32x128xf32> to vector<128xf32>
    %82 = vector.shape_cast %81 : vector<128xf32> to vector<1x128xf32>
    %83 = arith.mulf %71, %71 : vector<32x128xf32>
    %cst_9 = arith.constant dense<0.000000e+00> : vector<128xf32>
    %84 = vector.multi_reduction <add>, %83, %cst_9 [0] : vector<32x128xf32> to vector<128xf32>
    %85 = vector.shape_cast %84 : vector<128xf32> to vector<1x128xf32>
    %86 = tpu.concatenate %82, %85 in 0 : vector<1x128xf32>, vector<1x128xf32> -> vector<2x128xf32>
    %cst_10 = arith.constant dense<0.000000e+00> : vector<2x8xf32>
    %87 = tpu.matmul %86, %80, %cst_10 {dimension_numbers = #tpu.dot_dimension_numbers<[1], [1], [0], [0], [0, 0, 1, 0], [], []>} : vector<2x128xf32>, vector<8x128xf32>, vector<2x8xf32> -> vector<2x8xf32>
    %cst_11 = arith.constant 0.001953125 : f32
    %88 = vector.broadcast %cst_11 : f32 to vector<2x8xf32>
    %89 = arith.mulf %87, %88 : vector<2x8xf32>
    %cst_12 = arith.constant dense<0.000000e+00> : vector<2x128xf32>
    %90 = tpu.matmul %89, %80, %cst_12 {dimension_numbers = #tpu.dot_dimension_numbers<[1], [0], [0], [1], [0, 0, 1, 1], [], []>} : vector<2x8xf32>, vector<8x128xf32>, vector<2x128xf32> -> vector<2x128xf32>
    %91 = vector.extract_strided_slice %90 {offsets = [0, 0], sizes = [1, 128], strides = [1, 1]} : vector<2x128xf32> to vector<1x128xf32>
    %92 = vector.extract_strided_slice %90 {offsets = [1, 0], sizes = [1, 128], strides = [1, 1]} : vector<2x128xf32> to vector<1x128xf32>
    %93 = arith.mulf %91, %91 : vector<1x128xf32>
    %94 = arith.subf %92, %93 : vector<1x128xf32>
    %cst_13 = arith.constant 9.99999974E-6 : f32
    %95 = vector.broadcast %cst_13 : f32 to vector<1x128xf32>
    %96 = arith.addf %94, %95 : vector<1x128xf32>
    %97 = math.rsqrt %96 : vector<1x128xf32>
    %98 = arith.mulf %72, %97 : vector<1x128xf32>
    %99 = arith.mulf %91, %98 : vector<1x128xf32>
    %100 = arith.subf %73, %99 : vector<1x128xf32>
    %101 = vector.broadcast %98 : vector<1x128xf32> to vector<32x128xf32>
    %102 = arith.mulf %71, %101 : vector<32x128xf32>
    %103 = vector.broadcast %100 : vector<1x128xf32> to vector<32x128xf32>
    %104 = arith.addf %102, %103 : vector<32x128xf32>
    %cst_14 = arith.constant 0.000000e+00 : f32
    %105 = vector.broadcast %cst_14 : f32 to vector<32x128xf32>
    %106 = arith.maximumf %104, %105 : vector<32x128xf32>
    %107 = arith.truncf %106 : vector<32x128xf32> to vector<32x128xbf16>
    %c0_15 = arith.constant 0 : index
    %c0_16 = arith.constant 0 : index
    %108 = vector.load %arg4[%c0_15, %c0_16] : memref<128x256xbf16, #tpu.memory_space<vmem>>, vector<128x256xbf16>
    %cst_17 = arith.constant dense<0.000000e+00> : vector<32x256xf32>
    %109 = tpu.matmul %107, %108, %cst_17 {dimension_numbers = #tpu.dot_dimension_numbers<[1], [0], [0], [1], [0, 0, 1, 1], [], []>} : vector<32x128xbf16>, vector<128x256xbf16>, vector<32x256xf32> -> vector<32x256xf32>
    %110 = vector.extract_strided_slice %3 {offsets = [0, 0], sizes = [1, 256], strides = [1, 1]} : vector<4x256xf32> to vector<1x256xf32>
    %111 = vector.broadcast %110 : vector<1x256xf32> to vector<32x256xf32>
    %112 = arith.addf %109, %111 : vector<32x256xf32>
    %113 = vector.extract_strided_slice %3 {offsets = [1, 0], sizes = [1, 256], strides = [1, 1]} : vector<4x256xf32> to vector<1x256xf32>
    %114 = vector.extract_strided_slice %3 {offsets = [2, 0], sizes = [1, 256], strides = [1, 1]} : vector<4x256xf32> to vector<1x256xf32>
    %115 = vector.extract_strided_slice %3 {offsets = [3, 0], sizes = [1, 256], strides = [1, 1]} : vector<4x256xf32> to vector<1x256xf32>
    %116 = tpu.iota {dimensions = array<i32: 0>} : vector<16x256xi32>
    %117 = arith.fptosi %115 : vector<1x256xf32> to vector<1x256xi32>
    %118 = vector.broadcast %117 : vector<1x256xi32> to vector<16x256xi32>
    %119 = arith.cmpi eq, %116, %118 : vector<16x256xi32>
    %120 = arith.extui %119 : vector<16x256xi1> to vector<16x256xi32>
    %121 = arith.sitofp %120 : vector<16x256xi32> to vector<16x256xf32>
    %cst_18 = arith.constant dense<0.000000e+00> : vector<256xf32>
    %122 = vector.multi_reduction <add>, %112, %cst_18 [0] : vector<32x256xf32> to vector<256xf32>
    %123 = vector.shape_cast %122 : vector<256xf32> to vector<1x256xf32>
    %124 = arith.mulf %112, %112 : vector<32x256xf32>
    %cst_19 = arith.constant dense<0.000000e+00> : vector<256xf32>
    %125 = vector.multi_reduction <add>, %124, %cst_19 [0] : vector<32x256xf32> to vector<256xf32>
    %126 = vector.shape_cast %125 : vector<256xf32> to vector<1x256xf32>
    %127 = tpu.concatenate %123, %126 in 0 : vector<1x256xf32>, vector<1x256xf32> -> vector<2x256xf32>
    %cst_20 = arith.constant dense<0.000000e+00> : vector<2x16xf32>
    %128 = tpu.matmul %127, %121, %cst_20 {dimension_numbers = #tpu.dot_dimension_numbers<[1], [1], [0], [0], [0, 0, 1, 0], [], []>} : vector<2x256xf32>, vector<16x256xf32>, vector<2x16xf32> -> vector<2x16xf32>
    %cst_21 = arith.constant 0.001953125 : f32
    %129 = vector.broadcast %cst_21 : f32 to vector<2x16xf32>
    %130 = arith.mulf %128, %129 : vector<2x16xf32>
    %cst_22 = arith.constant dense<0.000000e+00> : vector<2x256xf32>
    %131 = tpu.matmul %130, %121, %cst_22 {dimension_numbers = #tpu.dot_dimension_numbers<[1], [0], [0], [1], [0, 0, 1, 1], [], []>} : vector<2x16xf32>, vector<16x256xf32>, vector<2x256xf32> -> vector<2x256xf32>
    %132 = vector.extract_strided_slice %131 {offsets = [0, 0], sizes = [1, 256], strides = [1, 1]} : vector<2x256xf32> to vector<1x256xf32>
    %133 = vector.extract_strided_slice %131 {offsets = [1, 0], sizes = [1, 256], strides = [1, 1]} : vector<2x256xf32> to vector<1x256xf32>
    %134 = arith.mulf %132, %132 : vector<1x256xf32>
    %135 = arith.subf %133, %134 : vector<1x256xf32>
    %cst_23 = arith.constant 9.99999974E-6 : f32
    %136 = vector.broadcast %cst_23 : f32 to vector<1x256xf32>
    %137 = arith.addf %135, %136 : vector<1x256xf32>
    %138 = math.rsqrt %137 : vector<1x256xf32>
    %139 = arith.mulf %113, %138 : vector<1x256xf32>
    %140 = arith.mulf %132, %139 : vector<1x256xf32>
    %141 = arith.subf %114, %140 : vector<1x256xf32>
    %142 = vector.broadcast %139 : vector<1x256xf32> to vector<32x256xf32>
    %143 = arith.mulf %112, %142 : vector<32x256xf32>
    %144 = vector.broadcast %141 : vector<1x256xf32> to vector<32x256xf32>
    %145 = arith.addf %143, %144 : vector<32x256xf32>
    %cst_24 = arith.constant 0.000000e+00 : f32
    %146 = vector.broadcast %cst_24 : f32 to vector<32x256xf32>
    %147 = arith.maximumf %145, %146 : vector<32x256xf32>
    %c0_25 = arith.constant 0 : index
    %c0_26 = arith.constant 0 : index
    %148 = vector.load %arg6[%c0_25, %c0_26] : memref<32x256xf32, #tpu.memory_space<vmem>>, vector<32x256xf32>
    tpu.vector_store %arg6[%c0_25, %c0_26], %147 {strides = array<i32>} : memref<32x256xf32, #tpu.memory_space<vmem>>, vector<32x256xf32>,
    return
  }
  func.func @transform_0(%arg0: i32) -> (i32, i32, i32) {
    %c0_i32 = arith.constant 0 : i32
    %c0_i32_0 = arith.constant 0 : i32
    %c0_i32_1 = arith.constant 0 : i32
    %c0_i32_2 = arith.constant 0 : i32
    return %c0_i32, %c0_i32_0, %c0_i32_1 : i32, i32, i32
  }
  func.func @transform_1(%arg0: i32) -> (i32, i32) {
    %c0_i32 = arith.constant 0 : i32
    %c0_i32_0 = arith.constant 0 : i32
    %c0_i32_1 = arith.constant 0 : i32
    return %c0_i32, %c0_i32_0 : i32, i32
  }
  func.func @transform_2(%arg0: i32) -> (i32, i32) {
    %c0_i32 = arith.constant 0 : i32
    %c0_i32_0 = arith.constant 0 : i32
    %c0_i32_1 = arith.constant 0 : i32
    return %c0_i32, %c0_i32_0 : i32, i32
  }
  func.func @transform_3(%arg0: i32) -> (i32, i32) {
    %c0_i32 = arith.constant 0 : i32
    %c0_i32_0 = arith.constant 0 : i32
    %c0_i32_1 = arith.constant 0 : i32
    return %c0_i32, %c0_i32_0 : i32, i32
  }
  func.func @transform_4(%arg0: i32) -> (i32, i32) {
    %c0_i32 = arith.constant 0 : i32
    %c0_i32_0 = arith.constant 0 : i32
    %c0_i32_1 = arith.constant 0 : i32
    return %c0_i32, %c0_i32_0 : i32, i32
  }
  func.func @transform_5(%arg0: i32) -> (i32, i32) {
    %c0_i32 = arith.constant 0 : i32
    %c0_i32_0 = arith.constant 0 : i32
    %c0_i32_1 = arith.constant 0 : i32
    return %c0_i32, %c0_i32_0 : i32, i32
  }
}

</mosaic_0001>

<llo_original>
// kernel: tpu_custom_call.1
$region0: #{tpu_custom_call.1}
  #allocation0 [shape = 'u32[]', space=smem, size = 0x4, offset = 0x4, fixed_abs, tag = 'smem constant byte address 0x4 - core index']
  #allocation1 [shape = 'u32[144,128]{1,0:T(1,128)}', space=vmem, size = 0x12000, scoped, tag = 'internal scratch']
  %s0 = inlined_call_operand.vmem [shape: f32[2,18,256], index: 0, kind: input, shape index: {}]
  %s1 = inlined_call_operand.vmem [shape: f32[9,128], index: 1, kind: input, shape index: {}]
  %s2 = inlined_call_operand.vmem [shape: f32[4,128], index: 2, kind: input, shape index: {}]
  %s3 = inlined_call_operand.vmem [shape: bf16[128,256], index: 3, kind: input, shape index: {}]
  %s4 = inlined_call_operand.vmem [shape: f32[4,256], index: 4, kind: input, shape index: {}]
  %s5 = inlined_call_operand.hbm [shape: f32[32,256], index: 5, kind: output, shape index: {}]
  %s6 = sld [smem:[#allocation0]]
  $region30: #{tpu_custom_call.1} parent=0
    _
  %s8 = ssub.s32 1, %s6
  %s9 = scalar_select 0, %s8, %s6
  $region1: #{tpu_custom_call.1} parent=0
    #allocation2 [shape = 'u8[32768]{0}', space=vmem, size = 0x8000, scoped, tag = 'output window, operand 0, single buffered']
    #allocation3 [shape = 's32[1]{0}', space=sflag, size = 0x4, scoped, tag = 'scoped memory for tpu_custom_call.1']
    %10 = vsyncpa [#allocation3], 0
    // Predicated region
    $region2: #{tpu_custom_call.1} parent=1 // pred_check
      _
    $region3: #{tpu_custom_call.1} parent=1 // pred_check_branch
      %12 = sbr.rel (0) target = $region5
    $region4: #{tpu_custom_call.1} parent=1 // pred_region
      _
    $region5: #{tpu_custom_call.1} parent=1 // pred_fallthru
      _
    // Predicated region
    $region6: #{tpu_custom_call.1} parent=1 // pred_check
      _
    $region7: #{tpu_custom_call.1} parent=1 // pred_check_branch
      %14 = sbr.rel (0) target = $region9
    $region8: #{tpu_custom_call.1} parent=1 // pred_region
      _
    $region9: #{tpu_custom_call.1} parent=1 // pred_fallthru
      _
    // Predicated region
    $region10: #{tpu_custom_call.1} parent=1 // pred_check
      _
    $region11: #{tpu_custom_call.1} parent=1 // pred_check_branch
      %16 = sbr.rel (0) target = $region13
    $region12: #{tpu_custom_call.1} parent=1 // pred_region
      _
    $region13: #{tpu_custom_call.1} parent=1 // pred_fallthru
      _
    // Predicated region
    $region14: #{tpu_custom_call.1} parent=1 // pred_check
      _
    $region15: #{tpu_custom_call.1} parent=1 // pred_check_branch
      %18 = sbr.rel (0) target = $region17
    $region16: #{tpu_custom_call.1} parent=1 // pred_region
      _
    $region17: #{tpu_custom_call.1} parent=1 // pred_fallthru
      _
    // Predicated region
    $region18: #{tpu_custom_call.1} parent=1 // pred_check
      _
    $region19: #{tpu_custom_call.1} parent=1 // pred_check_branch
      %20 = sbr.rel (0) target = $region21
    $region20: #{tpu_custom_call.1} parent=1 // pred_region
      _
    $region21: #{tpu_custom_call.1} parent=1 // pred_fallthru
      _
    %v22 = vld [vmem:[%s0] sm:$0xff]
    %v23 = vld [vmem:[%s0 + $0x8] sm:$0xff]
    %v24 = vld [vmem:[%s0 + $0x10] sm:$0xff]
    %v25 = vld [vmem:[%s0 + $0x18] sm:$0xff]
    %v26 = vld [vmem:[%s0 + $0x20] sm:$0x3]
    %v27 = vld [vmem:[%s0 + $0x28] sm:$0x3]
    %v28 = vld [vmem:[%s0 + $0x30] sm:$0xff]
    %v29 = vld [vmem:[%s0 + $0x38] sm:$0xff]
    %v30 = vld [vmem:[%s0 + $0x40] sm:$0xff]
    %v31 = vld [vmem:[%s0 + $0x48] sm:$0xff]
    %v32 = vld [vmem:[%s0 + $0x50] sm:$0x3]
    %v33 = vld [vmem:[%s0 + $0x58] sm:$0x3]
    %v34 = vld [vmem:[%s1] sm:$0xff]
    %v35 = vld [vmem:[%s1 + $0x8] sm:$0x1]
    %v36 = vld [vmem:[%s2] sm:$0xf]
    %v37 = vld [vmem:[%s4] sm:$0xff]
    %v38 = vlaneseq
    %v39 = vshrl.u32 %v38, 7
    %v40 = vsub.s32 0, %v39
    %v41 = vrot.slane %v34, %v40
    %v42 = vmul.f32 %v22, %v41
    %v43 = vmul.f32 %v24, %v41
    %v44 = vmul.f32 %v28, %v41
    %v45 = vmul.f32 %v30, %v41
    %v46 = vadd.f32 %v42, 0.0
    %v47 = vadd.f32 %v43, 0.0
    %v48 = vadd.f32 %v44, 0.0
    %v49 = vadd.f32 %v45, 0.0
    %v50 = vlaneseq
    %v51 = vshrl.u32 %v50, 7
    %v52 = vsub.s32 1, %v51
    %v53 = vrot.slane %v34, %v52
    %55 = vrot.lane.b32.xlu0 %v53, 8
    %v56 = vpop.permute.xlu0 %55
    %v58 = vmul.f32 %v22, %v56
    %v59 = vmul.f32 %v23, %v56
    %v60 = vmul.f32 %v24, %v56
    %v61 = vmul.f32 %v25, %v56
    %v62 = vmul.f32 %v28, %v56
    %v63 = vmul.f32 %v29, %v56
    %v64 = vmul.f32 %v30, %v56
    %v65 = vmul.f32 %v31, %v56
    %74 = vrot.lane.b32.xlu0 %v58, 120
    %v75 = vpop.permute.xlu0 %74
    %76 = vrot.lane.b32.xlu0 %v59, 120
    %v77 = vpop.permute.xlu0 %76
    %78 = vrot.lane.b32.xlu0 %v60, 120
    %v79 = vpop.permute.xlu0 %78
    %80 = vrot.lane.b32.xlu0 %v61, 120
    %v81 = vpop.permute.xlu0 %80
    %82 = vrot.lane.b32.xlu0 %v62, 120
    %v83 = vpop.permute.xlu0 %82
    %84 = vrot.lane.b32.xlu0 %v63, 120
    %v85 = vpop.permute.xlu0 %84
    %86 = vrot.lane.b32.xlu0 %v64, 120
    %v87 = vpop.permute.xlu0 %86
    %88 = vrot.lane.b32.xlu0 %v65, 120
    %v89 = vpop.permute.xlu0 %88
    %vm90 = vcmask 982016
    %v91 = vsel %vm90, %v75, %v77
    %v92 = vsel %vm90, %v79, %v81
    %v93 = vsel %vm90, %v83, %v85
    %v94 = vsel %vm90, %v87, %v89
    %v99 = vadd.f32 %v46, %v91
    %v100 = vadd.f32 %v47, %v92
    %v101 = vadd.f32 %v48, %v93
    %v102 = vadd.f32 %v49, %v94
    %v103 = vlaneseq
    %v104 = vshrl.u32 %v103, 7
    %v105 = vsub.s32 2, %v104
    %v106 = vrot.slane %v34, %v105
    %108 = vrot.lane.b32.xlu0 %v106, 16
    %v109 = vpop.permute.xlu0 %108
    %v111 = vmul.f32 %v22, %v109
    %v112 = vmul.f32 %v23, %v109
    %v113 = vmul.f32 %v24, %v109
    %v114 = vmul.f32 %v25, %v109
    %v115 = vmul.f32 %v28, %v109
    %v116 = vmul.f32 %v29, %v109
    %v117 = vmul.f32 %v30, %v109
    %v118 = vmul.f32 %v31, %v109
    %127 = vrot.lane.b32.xlu0 %v111, 112
    %v128 = vpop.permute.xlu0 %127
    %129 = vrot.lane.b32.xlu0 %v112, 112
    %v130 = vpop.permute.xlu0 %129
    %131 = vrot.lane.b32.xlu0 %v113, 112
    %v132 = vpop.permute.xlu0 %131
    %133 = vrot.lane.b32.xlu0 %v114, 112
    %v134 = vpop.permute.xlu0 %133
    %135 = vrot.lane.b32.xlu0 %v115, 112
    %v136 = vpop.permute.xlu0 %135
    %137 = vrot.lane.b32.xlu0 %v116, 112
    %v138 = vpop.permute.xlu0 %137
    %139 = vrot.lane.b32.xlu0 %v117, 112
    %v140 = vpop.permute.xlu0 %139
    %141 = vrot.lane.b32.xlu0 %v118, 112
    %v142 = vpop.permute.xlu0 %141
    %vm143 = vcmask 916480
    %v144 = vsel %vm143, %v128, %v130
    %v145 = vsel %vm143, %v132, %v134
    %v146 = vsel %vm143, %v136, %v138
    %v147 = vsel %vm143, %v140, %v142
    %v152 = vadd.f32 %v99, %v144
    %v153 = vadd.f32 %v100, %v145
    %v154 = vadd.f32 %v101, %v146
    %v155 = vadd.f32 %v102, %v147
    %v156 = vlaneseq
    %v157 = vshrl.u32 %v156, 7
    %v158 = vsub.s32 3, %v157
    %v159 = vrot.slane %v34, %v158
    %v160 = vmul.f32 %v22, %v159
    %v161 = vmul.f32 %v24, %v159
    %v162 = vmul.f32 %v26, %v159
    %v163 = vmul.f32 %v28, %v159
    %v164 = vmul.f32 %v30, %v159
    %v165 = vmul.f32 %v32, %v159
    %vm172 = vcmask 1046528
    %v173 = vrot.slane %v160, 1
    %v174 = vrot.slane %v161, 1
    %v175 = vsel %vm172, %v173, %v174
    %v176 = vrot.slane %v162, 1
    %v177 = vsel %vm172, %v174, %v176
    %v178 = vrot.slane %v163, 1
    %v179 = vrot.slane %v164, 1
    %v180 = vsel %vm172, %v178, %v179
    %v181 = vrot.slane %v165, 1
    %v182 = vsel %vm172, %v179, %v181
    %v187 = vadd.f32 %v152, %v175
    %v188 = vadd.f32 %v153, %v177
    %v189 = vadd.f32 %v154, %v180
    %v190 = vadd.f32 %v155, %v182
    %v191 = vlaneseq
    %v192 = vshrl.u32 %v191, 7
    %v193 = vsub.s32 4, %v192
    %v194 = vrot.slane %v34, %v193
    %196 = vrot.lane.b32.xlu0 %v194, 8
    %v197 = vpop.permute.xlu0 %196
    %v199 = vmul.f32 %v22, %v197
    %v200 = vmul.f32 %v23, %v197
    %v201 = vmul.f32 %v24, %v197
    %v202 = vmul.f32 %v25, %v197
    %v203 = vmul.f32 %v26, %v197
    %v204 = vmul.f32 %v27, %v197
    %v205 = vmul.f32 %v28, %v197
    %v206 = vmul.f32 %v29, %v197
    %v207 = vmul.f32 %v30, %v197
    %v208 = vmul.f32 %v31, %v197
    %v209 = vmul.f32 %v32, %v197
    %v210 = vmul.f32 %v33, %v197
    %v223 = vrot.slane %v199, 1
    %v224 = vrot.slane %v201, 1
    %v225 = vsel %vm172, %v223, %v224
    %v226 = vrot.slane %v200, 1
    %v227 = vrot.slane %v202, 1
    %v228 = vsel %vm172, %v226, %v227
    %v229 = vrot.slane %v203, 1
    %v230 = vsel %vm172, %v224, %v229
    %v231 = vrot.slane %v204, 1
    %v232 = vsel %vm172, %v227, %v231
    %v233 = vrot.slane %v205, 1
    %v234 = vrot.slane %v207, 1
    %v235 = vsel %vm172, %v233, %v234
    %v236 = vrot.slane %v206, 1
    %v237 = vrot.slane %v208, 1
    %v238 = vsel %vm172, %v236, %v237
    %v239 = vrot.slane %v209, 1
    %v240 = vsel %vm172, %v234, %v239
    %v241 = vrot.slane %v210, 1
    %v242 = vsel %vm172, %v237, %v241
    %243 = vrot.lane.b32.xlu0 %v225, 120
    %v244 = vpop.permute.xlu0 %243
    %245 = vrot.lane.b32.xlu0 %v228, 120
    %v246 = vpop.permute.xlu0 %245
    %247 = vrot.lane.b32.xlu0 %v230, 120
    %v248 = vpop.permute.xlu0 %247
    %249 = vrot.lane.b32.xlu0 %v232, 120
    %v250 = vpop.permute.xlu0 %249
    %251 = vrot.lane.b32.xlu0 %v235, 120
    %v252 = vpop.permute.xlu0 %251
    %253 = vrot.lane.b32.xlu0 %v238, 120
    %v254 = vpop.permute.xlu0 %253
    %255 = vrot.lane.b32.xlu0 %v240, 120
    %v256 = vpop.permute.xlu0 %255
    %257 = vrot.lane.b32.xlu0 %v242, 120
    %v258 = vpop.permute.xlu0 %257
    %v259 = vsel %vm90, %v244, %v246
    %v260 = vsel %vm90, %v248, %v250
    %v261 = vsel %vm90, %v252, %v254
    %v262 = vsel %vm90, %v256, %v258
    %v267 = vadd.f32 %v187, %v259
    %v268 = vadd.f32 %v188, %v260
    %v269 = vadd.f32 %v189, %v261
    %v270 = vadd.f32 %v190, %v262
    %v271 = vlaneseq
    %v272 = vshrl.u32 %v271, 7
    %v273 = vsub.s32 5, %v272
    %v274 = vrot.slane %v34, %v273
    %276 = vrot.lane.b32.xlu0 %v274, 16
    %v277 = vpop.permute.xlu0 %276
    %v279 = vmul.f32 %v22, %v277
    %v280 = vmul.f32 %v23, %v277
    %v281 = vmul.f32 %v24, %v277
    %v282 = vmul.f32 %v25, %v277
    %v283 = vmul.f32 %v26, %v277
    %v284 = vmul.f32 %v27, %v277
    %v285 = vmul.f32 %v28, %v277
    %v286 = vmul.f32 %v29, %v277
    %v287 = vmul.f32 %v30, %v277
    %v288 = vmul.f32 %v31, %v277
    %v289 = vmul.f32 %v32, %v277
    %v290 = vmul.f32 %v33, %v277
    %v303 = vrot.slane %v279, 1
    %v304 = vrot.slane %v281, 1
    %v305 = vsel %vm172, %v303, %v304
    %v306 = vrot.slane %v280, 1
    %v307 = vrot.slane %v282, 1
    %v308 = vsel %vm172, %v306, %v307
    %v309 = vrot.slane %v283, 1
    %v310 = vsel %vm172, %v304, %v309
    %v311 = vrot.slane %v284, 1
    %v312 = vsel %vm172, %v307, %v311
    %v313 = vrot.slane %v285, 1
    %v314 = vrot.slane %v287, 1
    %v315 = vsel %vm172, %v313, %v314
    %v316 = vrot.slane %v286, 1
    %v317 = vrot.slane %v288, 1
    %v318 = vsel %vm172, %v316, %v317
    %v319 = vrot.slane %v289, 1
    %v320 = vsel %vm172, %v314, %v319
    %v321 = vrot.slane %v290, 1
    %v322 = vsel %vm172, %v317, %v321
    %323 = vrot.lane.b32.xlu0 %v305, 112
    %v324 = vpop.permute.xlu0 %323
    %325 = vrot.lane.b32.xlu0 %v308, 112
    %v326 = vpop.permute.xlu0 %325
    %327 = vrot.lane.b32.xlu0 %v310, 112
    %v328 = vpop.permute.xlu0 %327
    %329 = vrot.lane.b32.xlu0 %v312, 112
    %v330 = vpop.permute.xlu0 %329
    %331 = vrot.lane.b32.xlu0 %v315, 112
    %v332 = vpop.permute.xlu0 %331
    %333 = vrot.lane.b32.xlu0 %v318, 112
    %v334 = vpop.permute.xlu0 %333
    %335 = vrot.lane.b32.xlu0 %v320, 112
    %v336 = vpop.permute.xlu0 %335
    %337 = vrot.lane.b32.xlu0 %v322, 112
    %v338 = vpop.permute.xlu0 %337
    %v339 = vsel %vm143, %v324, %v326
    %v340 = vsel %vm143, %v328, %v330
    %v341 = vsel %vm143, %v332, %v334
    %v342 = vsel %vm143, %v336, %v338
    %v347 = vadd.f32 %v267, %v339
    %v348 = vadd.f32 %v268, %v340
    %v349 = vadd.f32 %v269, %v341
    %v350 = vadd.f32 %v270, %v342
    %v351 = vlaneseq
    %v352 = vshrl.u32 %v351, 7
    %v353 = vsub.s32 6, %v352
    %v354 = vrot.slane %v34, %v353
    %v355 = vmul.f32 %v22, %v354
    %v356 = vmul.f32 %v24, %v354
    %v357 = vmul.f32 %v26, %v354
    %v358 = vmul.f32 %v28, %v354
    %v359 = vmul.f32 %v30, %v354
    %v360 = vmul.f32 %v32, %v354
    %vm367 = vcmask 1045504
    %v368 = vrot.slane %v355, 2
    %v369 = vrot.slane %v356, 2
    %v370 = vsel %vm367, %v368, %v369
    %v371 = vrot.slane %v357, 2
    %v372 = vsel %vm367, %v369, %v371
    %v373 = vrot.slane %v358, 2
    %v374 = vrot.slane %v359, 2
    %v375 = vsel %vm367, %v373, %v374
    %v376 = vrot.slane %v360, 2
    %v377 = vsel %vm367, %v374, %v376
    %v382 = vadd.f32 %v347, %v370
    %v383 = vadd.f32 %v348, %v372
    %v384 = vadd.f32 %v349, %v375
    %v385 = vadd.f32 %v350, %v377
    %v386 = vlaneseq
    %v387 = vshrl.u32 %v386, 7
    %v388 = vsub.s32 7, %v387
    %v389 = vrot.slane %v34, %v388
    %391 = vrot.lane.b32.xlu0 %v389, 8
    %v392 = vpop.permute.xlu0 %391
    %v394 = vmul.f32 %v22, %v392
    %v395 = vmul.f32 %v23, %v392
    %v396 = vmul.f32 %v24, %v392
    %v397 = vmul.f32 %v25, %v392
    %v398 = vmul.f32 %v26, %v392
    %v399 = vmul.f32 %v27, %v392
    %v400 = vmul.f32 %v28, %v392
    %v401 = vmul.f32 %v29, %v392
    %v402 = vmul.f32 %v30, %v392
    %v403 = vmul.f32 %v31, %v392
    %v404 = vmul.f32 %v32, %v392
    %v405 = vmul.f32 %v33, %v392
    %v418 = vrot.slane %v394, 2
    %v419 = vrot.slane %v396, 2
    %v420 = vsel %vm367, %v418, %v419
    %v421 = vrot.slane %v395, 2
    %v422 = vrot.slane %v397, 2
    %v423 = vsel %vm367, %v421, %v422
    %v424 = vrot.slane %v398, 2
    %v425 = vsel %vm367, %v419, %v424
    %v426 = vrot.slane %v399, 2
    %v427 = vsel %vm367, %v422, %v426
    %v428 = vrot.slane %v400, 2
    %v429 = vrot.slane %v402, 2
    %v430 = vsel %vm367, %v428, %v429
    %v431 = vrot.slane %v401, 2
    %v432 = vrot.slane %v403, 2
    %v433 = vsel %vm367, %v431, %v432
    %v434 = vrot.slane %v404, 2
    %v435 = vsel %vm367, %v429, %v434
    %v436 = vrot.slane %v405, 2
    %v437 = vsel %vm367, %v432, %v436
    %438 = vrot.lane.b32.xlu0 %v420, 120
    %v439 = vpop.permute.xlu0 %438
    %440 = vrot.lane.b32.xlu0 %v423, 120
    %v441 = vpop.permute.xlu0 %440
    %442 = vrot.lane.b32.xlu0 %v425, 120
    %v443 = vpop.permute.xlu0 %442
    %444 = vrot.lane.b32.xlu0 %v427, 120
    %v445 = vpop.permute.xlu0 %444
    %446 = vrot.lane.b32.xlu0 %v430, 120
    %v447 = vpop.permute.xlu0 %446
    %448 = vrot.lane.b32.xlu0 %v433, 120
    %v449 = vpop.permute.xlu0 %448
    %450 = vrot.lane.b32.xlu0 %v435, 120
    %v451 = vpop.permute.xlu0 %450
    %452 = vrot.lane.b32.xlu0 %v437, 120
    %v453 = vpop.permute.xlu0 %452
    %v454 = vsel %vm90, %v439, %v441
    %v455 = vsel %vm90, %v443, %v445
    %v456 = vsel %vm90, %v447, %v449
    %v457 = vsel %vm90, %v451, %v453
    %v462 = vadd.f32 %v382, %v454
    %v463 = vadd.f32 %v383, %v455
    %v464 = vadd.f32 %v384, %v456
    %v465 = vadd.f32 %v385, %v457
    %v466 = vlaneseq
    %v467 = vshrl.u32 %v466, 7
    %v468 = vsub.s32 0, %v467
    %v469 = vrot.slane %v35, %v468
    %471 = vrot.lane.b32.xlu0 %v469, 16
    %v472 = vpop.permute.xlu0 %471
    %v474 = vmul.f32 %v22, %v472
    %v475 = vmul.f32 %v23, %v472
    %v476 = vmul.f32 %v24, %v472
    %v477 = vmul.f32 %v25, %v472
    %v478 = vmul.f32 %v26, %v472
    %v479 = vmul.f32 %v27, %v472
    %v480 = vmul.f32 %v28, %v472
    %v481 = vmul.f32 %v29, %v472
    %v482 = vmul.f32 %v30, %v472
    %v483 = vmul.f32 %v31, %v472
    %v484 = vmul.f32 %v32, %v472
    %v485 = vmul.f32 %v33, %v472
    %v498 = vrot.slane %v474, 2
    %v499 = vrot.slane %v476, 2
    %v500 = vsel %vm367, %v498, %v499
    %v501 = vrot.slane %v475, 2
    %v502 = vrot.slane %v477, 2
    %v503 = vsel %vm367, %v501, %v502
    %v504 = vrot.slane %v478, 2
    %v505 = vsel %vm367, %v499, %v504
    %v506 = vrot.slane %v479, 2
    %v507 = vsel %vm367, %v502, %v506
    %v508 = vrot.slane %v480, 2
    %v509 = vrot.slane %v482, 2
    %v510 = vsel %vm367, %v508, %v509
    %v511 = vrot.slane %v481, 2
    %v512 = vrot.slane %v483, 2
    %v513 = vsel %vm367, %v511, %v512
    %v514 = vrot.slane %v484, 2
    %v515 = vsel %vm367, %v509, %v514
    %v516 = vrot.slane %v485, 2
    %v517 = vsel %vm367, %v512, %v516
    %518 = vrot.lane.b32.xlu0 %v500, 112
    %v519 = vpop.permute.xlu0 %518
    %520 = vrot.lane.b32.xlu0 %v503, 112
    %v521 = vpop.permute.xlu0 %520
    %522 = vrot.lane.b32.xlu0 %v505, 112
    %v523 = vpop.permute.xlu0 %522
    %524 = vrot.lane.b32.xlu0 %v507, 112
    %v525 = vpop.permute.xlu0 %524
    %526 = vrot.lane.b32.xlu0 %v510, 112
    %v527 = vpop.permute.xlu0 %526
    %528 = vrot.lane.b32.xlu0 %v513, 112
    %v529 = vpop.permute.xlu0 %528
    %530 = vrot.lane.b32.xlu0 %v515, 112
    %v531 = vpop.permute.xlu0 %530
    %532 = vrot.lane.b32.xlu0 %v517, 112
    %v533 = vpop.permute.xlu0 %532
    %v534 = vsel %vm143, %v519, %v521
    %v535 = vsel %vm143, %v523, %v525
    %v536 = vsel %vm143, %v527, %v529
    %v537 = vsel %vm143, %v531, %v533
    %v542 = vadd.f32 %v462, %v534
    %v543 = vadd.f32 %v463, %v535
    %v544 = vadd.f32 %v464, %v536
    %v545 = vadd.f32 %v465, %v537
    %v546 = vlaneseq
    %v547 = vshrl.u32 %v546, 7
    %v548 = vsub.s32 0, %v547
    %v549 = vrot.slane %v36, %v548
    %v550 = vadd.f32 %v542, %v549
    %v551 = vadd.f32 %v543, %v549
    %v552 = vadd.f32 %v544, %v549
    %v553 = vadd.f32 %v545, %v549
    %v554 = vlaneseq
    %v555 = vshrl.u32 %v554, 7
    %v556 = vcvt.f32.s32.to.zero.pseudo %v36
    %v557 = vlaneseq
    %v558 = vshrl.u32 %v557, 7
    %v559 = vsub.s32 3, %v558
    %v560 = vrot.slane %v556, %v559
    %vm561 = vcmp.eq.s32.totalorder %v555, %v560
    %v562 = vsel %vm561, 1, 0
    %v563 = vcvt.s32.f32 %v562
    %v564 = vadd.f32 %v550, %v551
    %v565 = vadd.f32 %v564, %v552
    %v566 = vadd.f32 %v565, %v553
    %v567 = vrot.slane %v566, 4
    %v568 = vadd.f32 %v566, %v567
    %v569 = vrot.slane %v568, 2
    %v570 = vadd.f32 %v568, %v569
    %v571 = vrot.slane %v570, 1
    %v572 = vadd.f32 %v570, %v571
    %v573 = vmul.f32 %v550, %v550
    %v574 = vmul.f32 %v551, %v551
    %v575 = vmul.f32 %v552, %v552
    %v576 = vmul.f32 %v553, %v553
    %v577 = vadd.f32 %v573, %v574
    %v578 = vadd.f32 %v577, %v575
    %v579 = vadd.f32 %v578, %v576
    %v580 = vrot.slane %v579, 4
    %v581 = vadd.f32 %v579, %v580
    %v582 = vrot.slane %v581, 2
    %v583 = vadd.f32 %v581, %v582
    %v584 = vrot.slane %v583, 1
    %v585 = vadd.f32 %v583, %v584
    %vm586 = vcmask 1040384
    %v587 = vsel %vm586, %v572, %v585
    %588 = vmatprep.subr.mxu0 0.0
    %589 = vmatpush1.xpose.msra.mxu0 %v563
    %590 = vmatprep.subr.mxu0 0.0
    %591 = vmatpush1.xpose.msra.mxu0 0.0
    %592 = vmatprep.subr.mxu0 0.0
    %593 = vmatpush1.xpose.msra.mxu0 0.0
    %594 = vmatprep.subr.mxu0 0.0
    %595 = vmatpush1.xpose.msra.mxu0 0.0
    %596 = vmatprep.subr.mxu0 0.0
    %597 = vmatpush1.xpose.msra.mxu0 0.0
    %598 = vmatprep.subr.mxu0 0.0
    %599 = vmatpush1.xpose.msra.mxu0 0.0
    %600 = vmatprep.subr.mxu0 0.0
    %601 = vmatpush1.xpose.msra.mxu0 0.0
    %602 = vmatprep.subr.mxu0 0.0
    %603 = vmatpush1.xpose.msra.mxu0 0.0
    %604 = vmatprep.subr.mxu0 0.0
    %605 = vmatpush1.xpose.msra.mxu0 0.0
    %606 = vmatprep.subr.mxu0 0.0
    %607 = vmatpush1.xpose.msra.mxu0 0.0
    %608 = vmatprep.subr.mxu0 0.0
    %609 = vmatpush1.xpose.msra.mxu0 0.0
    %610 = vmatprep.subr.mxu0 0.0
    %611 = vmatpush1.xpose.msra.mxu0 0.0
    %612 = vmatprep.subr.mxu0 0.0
    %613 = vmatpush1.xpose.msra.mxu0 0.0
    %614 = vmatprep.subr.mxu0 0.0
    %615 = vmatpush1.xpose.msra.mxu0 0.0
    %616 = vmatprep.subr.mxu0 0.0
    %617 = vmatpush1.xpose.msra.mxu0 0.0
    %618 = vmatprep.subr.mxu0 0.0
    %619 = vmatpush1.xpose.msra.mxu0 0.0
    %620 = vmatprep.subr.mxu0 0.0
    %621 = vmatpush1.xpose.msra.mxu0 0.0
    %622 = vmatprep.subr.mxu0 0.0
    %623 = vmatpush1.xpose.msra.mxu0 0.0
    %624 = vmatprep.subr.mxu0 0.0
    %625 = vmatpush1.xpose.msra.mxu0 0.0
    %626 = vmatprep.subr.mxu0 0.0
    %627 = vmatpush1.xpose.msra.mxu0 0.0
    %628 = vmatprep.subr.mxu0 0.0
    %629 = vmatpush1.xpose.msra.mxu0 0.0
    %630 = vmatprep.subr.mxu0 0.0
    %631 = vmatpush1.xpose.msra.mxu0 0.0
    %632 = vmatprep.subr.mxu0 0.0
    %633 = vmatpush1.xpose.msra.mxu0 0.0
    %634 = vmatprep.subr.mxu0 0.0
    %635 = vmatpush1.xpose.msra.mxu0 0.0
    %636 = vmatprep.subr.mxu0 0.0
    %637 = vmatpush1.xpose.msra.mxu0 0.0
    %638 = vmatprep.subr.mxu0 0.0
    %639 = vmatpush1.xpose.msra.mxu0 0.0
    %640 = vmatprep.subr.mxu0 0.0
    %641 = vmatpush1.xpose.msra.mxu0 0.0
    %642 = vmatprep.subr.mxu0 0.0
    %643 = vmatpush1.xpose.msra.mxu0 0.0
    %644 = vmatprep.subr.mxu0 0.0
    %645 = vmatpush1.xpose.msra.mxu0 0.0
    %646 = vmatprep.subr.mxu0 0.0
    %647 = vmatpush1.xpose.msra.mxu0 0.0
    %648 = vmatprep.subr.mxu0 0.0
    %649 = vmatpush1.xpose.msra.mxu0 0.0
    %650 = vmatprep.subr.mxu0 0.0
    %651 = vmatpush1.xpose.msra.mxu0 0.0
    %652 = vmatprep.mubr.f32.mxu0 0.0
    %653 = vmatmul.mubr.f32.gmra.mrb[0].mxu0 %v587
    %v654 = vpop.f32.mrb[0].mxu0
    %v655 = vadd.f32 0.0, %v654
    %v656 = vpop.f32.mrb[0].mxu0
    %657 = vdwg.mxu0
    %v658 = vmul.f32 %v655, 0.001953125
    %vm659 = vcmask 64512
    %v661 = vsel %vm659, %v658, 0
    %663 = vmatprep.subr.mxu0 0.0
    %664 = vmatpush1.msra.mxu0 %v563
    %665 = vmatprep.subr.mxu0 0.0
    %666 = vmatpush1.msra.mxu0 0.0
    %667 = vmatprep.subr.mxu0 0.0
    %668 = vmatpush1.msra.mxu0 0.0
    %669 = vmatprep.subr.mxu0 0.0
    %670 = vmatpush1.msra.mxu0 0.0
    %671 = vmatprep.subr.mxu0 0.0
    %672 = vmatpush1.msra.mxu0 0.0
    %673 = vmatprep.subr.mxu0 0.0
    %674 = vmatpush1.msra.mxu0 0.0
    %675 = vmatprep.subr.mxu0 0.0
    %676 = vmatpush1.msra.mxu0 0.0
    %677 = vmatprep.subr.mxu0 0.0
    %678 = vmatpush1.msra.mxu0 0.0
    %679 = vmatprep.subr.mxu0 0.0
    %680 = vmatpush1.msra.mxu0 0.0
    %681 = vmatprep.subr.mxu0 0.0
    %682 = vmatpush1.msra.mxu0 0.0
    %683 = vmatprep.subr.mxu0 0.0
    %684 = vmatpush1.msra.mxu0 0.0
    %685 = vmatprep.subr.mxu0 0.0
    %686 = vmatpush1.msra.mxu0 0.0
    %687 = vmatprep.subr.mxu0 0.0
    %688 = vmatpush1.msra.mxu0 0.0
    %689 = vmatprep.subr.mxu0 0.0
    %690 = vmatpush1.msra.mxu0 0.0
    %691 = vmatprep.subr.mxu0 0.0
    %692 = vmatpush1.msra.mxu0 0.0
    %693 = vmatprep.subr.mxu0 0.0
    %694 = vmatpush1.msra.mxu0 0.0
    %695 = vmatprep.subr.mxu0 0.0
    %696 = vmatpush1.msra.mxu0 0.0
    %697 = vmatprep.subr.mxu0 0.0
    %698 = vmatpush1.msra.mxu0 0.0
    %699 = vmatprep.subr.mxu0 0.0
    %700 = vmatpush1.msra.mxu0 0.0
    %701 = vmatprep.subr.mxu0 0.0
    %702 = vmatpush1.msra.mxu0 0.0
    %703 = vmatprep.subr.mxu0 0.0
    %704 = vmatpush1.msra.mxu0 0.0
    %705 = vmatprep.subr.mxu0 0.0
    %706 = vmatpush1.msra.mxu0 0.0
    %707 = vmatprep.subr.mxu0 0.0
    %708 = vmatpush1.msra.mxu0 0.0
    %709 = vmatprep.subr.mxu0 0.0
    %710 = vmatpush1.msra.mxu0 0.0
    %711 = vmatprep.subr.mxu0 0.0
    %712 = vmatpush1.msra.mxu0 0.0
    %713 = vmatprep.subr.mxu0 0.0
    %714 = vmatpush1.msra.mxu0 0.0
    %715 = vmatprep.subr.mxu0 0.0
    %716 = vmatpush1.msra.mxu0 0.0
    %717 = vmatprep.subr.mxu0 0.0
    %718 = vmatpush1.msra.mxu0 0.0
    %719 = vmatprep.subr.mxu0 0.0
    %720 = vmatpush1.msra.mxu0 0.0
    %721 = vmatprep.subr.mxu0 0.0
    %722 = vmatpush1.msra.mxu0 0.0
    %723 = vmatprep.subr.mxu0 0.0
    %724 = vmatpush1.msra.mxu0 0.0
    %725 = vmatprep.subr.mxu0 0.0
    %726 = vmatpush1.msra.mxu0 0.0
    %727 = vmatprep.mubr.f32.mxu0 0.0
    %728 = vmatmul.mubr.f32.gmra.mrb[0].mxu0 %v661
    %v729 = vpop.f32.mrb[0].mxu0
    %v730 = vadd.f32 0.0, %v729
    %v731 = vpop.f32.mrb[0].mxu0
    %732 = vdwg.mxu0
    %v733 = vmul.f32 %v730, %v730
    %v735 = vrot.slane %v733, 7
    %v737 = vsub.f32 %v730, %v735
    %v738 = vadd.f32 %v737, 1e-05
    %v739 = vrsqrt.pop %v738
    %v740 = vmul.f32 %v36, %v739
    %v742 = vrot.slane %v740, 1
    %v744 = vmul.f32 %v730, %v742
    %v746 = vrot.slane %v744, 6
    %v748 = vsub.f32 %v36, %v746
    %v749 = vlaneseq
    %v750 = vshrl.u32 %v749, 7
    %v751 = vsub.s32 1, %v750
    %v752 = vrot.slane %v740, %v751
    %v753 = vmul.f32 %v550, %v752
    %v754 = vmul.f32 %v551, %v752
    %v755 = vmul.f32 %v552, %v752
    %v756 = vmul.f32 %v553, %v752
    %v757 = vlaneseq
    %v758 = vshrl.u32 %v757, 7
    %v759 = vsub.s32 2, %v758
    %v760 = vrot.slane %v748, %v759
    %v761 = vadd.f32 %v753, %v760
    %v762 = vadd.f32 %v754, %v760
    %v763 = vadd.f32 %v755, %v760
    %v764 = vadd.f32 %v756, %v760
    %v765 = vmax.f32 %v761, 0.0
    %v766 = vmax.f32 %v762, 0.0
    %v767 = vmax.f32 %v763, 0.0
    %v768 = vmax.f32 %v764, 0.0
    %v769 = vpack.c.bf16 %v766, %v765
    %v770 = vpack.c.bf16 %v768, %v767
    %v771 = vld [vmem:[%s3] sm:$0xff]
    %v772 = vld [vmem:[%s3 + $0x8] sm:$0xff]
    %v773 = vld [vmem:[%s3 + $0x10] sm:$0xff]
    %v774 = vld [vmem:[%s3 + $0x18] sm:$0xff]
    %v775 = vld [vmem:[%s3 + $0x20] sm:$0xff]
    %v776 = vld [vmem:[%s3 + $0x28] sm:$0xff]
    %v777 = vld [vmem:[%s3 + $0x30] sm:$0xff]
    %v778 = vld [vmem:[%s3 + $0x38] sm:$0xff]
    %v779 = vld [vmem:[%s3 + $0x40] sm:$0xff]
    %v780 = vld [vmem:[%s3 + $0x48] sm:$0xff]
    %v781 = vld [vmem:[%s3 + $0x50] sm:$0xff]
    %v782 = vld [vmem:[%s3 + $0x58] sm:$0xff]
    %v783 = vld [vmem:[%s3 + $0x60] sm:$0xff]
    %v784 = vld [vmem:[%s3 + $0x68] sm:$0xff]
    %v785 = vld [vmem:[%s3 + $0x70] sm:$0xff]
    %v786 = vld [vmem:[%s3 + $0x78] sm:$0xff]
    %v788 = vlaneseq
    %v789 = vshrl.u32 %v788, 7
    %v790 = vsub.s32 0, %v789
    %v791 = vrot.slane %v37, %v790
    %v792 = vlaneseq
    %v793 = vshrl.u32 %v792, 7
    %v794 = vsub.s32 4, %v793
    %v795 = vrot.slane %v37, %v794
    %v798 = vlaneseq
    %v799 = vshrl.u32 %v798, 7
    %v800 = vsub.s32 0, %v799
    %v801 = vrot.slane %v791, %v800
    %v802 = vlaneseq
    %v803 = vshrl.u32 %v802, 7
    %v804 = vsub.s32 0, %v803
    %v805 = vrot.slane %v795, %v804
    %v822 = vunpack.c.l.b16 %v771
    %v823 = vunpack.c.h.b16 %v771
    %v824 = vunpack.c.l.b16 %v772
    %v825 = vunpack.c.h.b16 %v772
    %v826 = vunpack.c.l.b16 %v773
    %v827 = vunpack.c.h.b16 %v773
    %v828 = vunpack.c.l.b16 %v774
    %v829 = vunpack.c.h.b16 %v774
    %v830 = vunpack.c.l.b16 %v775
    %v831 = vunpack.c.h.b16 %v775
    %v832 = vunpack.c.l.b16 %v776
    %v833 = vunpack.c.h.b16 %v776
    %v834 = vunpack.c.l.b16 %v777
    %v835 = vunpack.c.h.b16 %v777
    %v836 = vunpack.c.l.b16 %v778
    %v837 = vunpack.c.h.b16 %v778
    %v838 = vunpack.c.l.b16 %v779
    %v839 = vunpack.c.h.b16 %v779
    %v840 = vunpack.c.l.b16 %v780
    %v841 = vunpack.c.h.b16 %v780
    %v842 = vunpack.c.l.b16 %v781
    %v843 = vunpack.c.h.b16 %v781
    %v844 = vunpack.c.l.b16 %v782
    %v845 = vunpack.c.h.b16 %v782
    %v846 = vunpack.c.l.b16 %v783
    %v847 = vunpack.c.h.b16 %v783
    %v848 = vunpack.c.l.b16 %v784
    %v849 = vunpack.c.h.b16 %v784
    %v850 = vunpack.c.l.b16 %v785
    %v851 = vunpack.c.h.b16 %v785
    %v852 = vunpack.c.l.b16 %v786
    %v853 = vunpack.c.h.b16 %v786
    %v854 = vpack.c.b16 %v824, %v822
    %v855 = vpack.c.b16 %v825, %v823
    %v856 = vpack.c.b16 %v828, %v826
    %v857 = vpack.c.b16 %v829, %v827
    %v858 = vpack.c.b16 %v832, %v830
    %v859 = vpack.c.b16 %v833, %v831
    %v860 = vpack.c.b16 %v836, %v834
    %v861 = vpack.c.b16 %v837, %v835
    %v862 = vpack.c.b16 %v840, %v838
    %v863 = vpack.c.b16 %v841, %v839
    %v864 = vpack.c.b16 %v844, %v842
    %v865 = vpack.c.b16 %v845, %v843
    %v866 = vpack.c.b16 %v848, %v846
    %v867 = vpack.c.b16 %v849, %v847
    %v868 = vpack.c.b16 %v852, %v850
    %v869 = vpack.c.b16 %v853, %v851
    %886 = vmatprep.subr.bf16.mxu0 %v855
    %887 = vmatpush1.bf16.msra.mxu0 %v854
    %888 = vmatprep.subr.bf16.mxu0 %v857
    %889 = vmatpush1.bf16.msra.mxu0 %v856
    %890 = vmatprep.subr.bf16.mxu0 %v859
    %891 = vmatpush1.bf16.msra.mxu0 %v858
    %892 = vmatprep.subr.bf16.mxu0 %v861
    %893 = vmatpush1.bf16.msra.mxu0 %v860
    %894 = vmatprep.subr.bf16.mxu0 %v863
    %895 = vmatpush1.bf16.msra.mxu0 %v862
    %896 = vmatprep.subr.bf16.mxu0 %v865
    %897 = vmatpush1.bf16.msra.mxu0 %v864
    %898 = vmatprep.subr.bf16.mxu0 %v867
    %899 = vmatpush1.bf16.msra.mxu0 %v866
    %900 = vmatprep.subr.bf16.mxu0 %v869
    %901 = vmatpush1.bf16.msra.mxu0 %v868
    %902 = vmatprep.subr.bf16.mxu0 0
    %903 = vmatpush1.bf16.msra.mxu0 0
    %904 = vmatprep.subr.bf16.mxu0 0
    %905 = vmatpush1.bf16.msra.mxu0 0
    %906 = vmatprep.subr.bf16.mxu0 0
    %907 = vmatpush1.bf16.msra.mxu0 0
    %908 = vmatprep.subr.bf16.mxu0 0
    %909 = vmatpush1.bf16.msra.mxu0 0
    %910 = vmatprep.subr.bf16.mxu0 0
    %911 = vmatpush1.bf16.msra.mxu0 0
    %912 = vmatprep.subr.bf16.mxu0 0
    %913 = vmatpush1.bf16.msra.mxu0 0
    %914 = vmatprep.subr.bf16.mxu0 0
    %915 = vmatpush1.bf16.msra.mxu0 0
    %916 = vmatprep.subr.bf16.mxu0 0
    %917 = vmatpush1.bf16.msra.mxu0 0
    %918 = vmatprep.mubr.bf16.mxu0 0
    %919 = vmatmul.mubr.bf16.gmra.mrb[0].mxu0 %v769
    %v920 = vpop.f32.mrb[0].mxu0
    %v921 = vadd.f32 %v801, %v920
    %v922 = vpop.f32.mrb[0].mxu0
    %v923 = vadd.f32 %v805, %v922
    %v924 = vpop.f32.mrb[0].mxu0
    %v925 = vadd.f32 %v801, %v924
    %v926 = vpop.f32.mrb[0].mxu0
    %v927 = vadd.f32 %v805, %v926
    %928 = vmatprep.mubr.bf16.mxu0 0
    %929 = vmatmul.mubr.bf16.gmra.mrb[0].mxu0 %v770
    %v930 = vpop.f32.mrb[0].mxu0
    %v931 = vadd.f32 %v801, %v930
    %v932 = vpop.f32.mrb[0].mxu0
    %v933 = vadd.f32 %v805, %v932
    %v934 = vpop.f32.mrb[0].mxu0
    %v935 = vadd.f32 %v801, %v934
    %v936 = vpop.f32.mrb[0].mxu0
    %v937 = vadd.f32 %v805, %v936
    %938 = vdwg.mxu0
    %v939 = vadd.s32 %v555, 8
    %v940 = vcvt.f32.s32.to.zero.pseudo %v37
    %v941 = vlaneseq
    %v942 = vshrl.u32 %v941, 7
    %v943 = vsub.s32 3, %v942
    %v944 = vrot.slane %v940, %v943
    %v945 = vlaneseq
    %v946 = vshrl.u32 %v945, 7
    %v947 = vsub.s32 7, %v946
    %v948 = vrot.slane %v940, %v947
    %v949 = vlaneseq
    %v950 = vshrl.u32 %v949, 7
    %v951 = vsub.s32 3, %v950
    %v952 = vrot.slane %v944, %v951
    %v953 = vlaneseq
    %v954 = vshrl.u32 %v953, 7
    %v955 = vsub.s32 3, %v954
    %v956 = vrot.slane %v948, %v955
    %vm957 = vcmp.eq.s32.totalorder %v555, %v952
    %vm958 = vcmp.eq.s32.totalorder %v555, %v956
    %vm959 = vcmp.eq.s32.totalorder %v939, %v952
    %vm960 = vcmp.eq.s32.totalorder %v939, %v956
    %v961 = vsel %vm957, 1, 0
    %v962 = vsel %vm958, 1, 0
    %v963 = vsel %vm959, 1, 0
    %v964 = vsel %vm960, 1, 0
    %v965 = vcvt.s32.f32 %v961
    %v966 = vcvt.s32.f32 %v962
    %v967 = vcvt.s32.f32 %v963
    %v968 = vcvt.s32.f32 %v964
    %v969 = vadd.f32 %v921, %v925
    %v970 = vadd.f32 %v969, %v931
    %v971 = vadd.f32 %v970, %v935
    %v972 = vrot.slane %v971, 4
    %v973 = vadd.f32 %v971, %v972
    %v974 = vrot.slane %v973, 2
    %v975 = vadd.f32 %v973, %v974
    %v976 = vrot.slane %v975, 1
    %v977 = vadd.f32 %v975, %v976
    %v978 = vadd.f32 %v923, %v927
    %v979 = vadd.f32 %v978, %v933
    %v980 = vadd.f32 %v979, %v937
    %v981 = vrot.slane %v980, 4
    %v982 = vadd.f32 %v980, %v981
    %v983 = vrot.slane %v982, 2
    %v984 = vadd.f32 %v982, %v983
    %v985 = vrot.slane %v984, 1
    %v986 = vadd.f32 %v984, %v985
    %v987 = vmul.f32 %v921, %v921
    %v988 = vmul.f32 %v923, %v923
    %v989 = vmul.f32 %v925, %v925
    %v990 = vmul.f32 %v927, %v927
    %v991 = vmul.f32 %v931, %v931
    %v992 = vmul.f32 %v933, %v933
    %v993 = vmul.f32 %v935, %v935
    %v994 = vmul.f32 %v937, %v937
    %v995 = vadd.f32 %v987, %v989
    %v996 = vadd.f32 %v995, %v991
    %v997 = vadd.f32 %v996, %v993
    %v998 = vrot.slane %v997, 4
    %v999 = vadd.f32 %v997, %v998
    %v1000 = vrot.slane %v999, 2
    %v1001 = vadd.f32 %v999, %v1000
    %v1002 = vrot.slane %v1001, 1
    %v1003 = vadd.f32 %v1001, %v1002
    %v1004 = vadd.f32 %v988, %v990
    %v1005 = vadd.f32 %v1004, %v992
    %v1006 = vadd.f32 %v1005, %v994
    %v1007 = vrot.slane %v1006, 4
    %v1008 = vadd.f32 %v1006, %v1007
    %v1009 = vrot.slane %v1008, 2
    %v1010 = vadd.f32 %v1008, %v1009
    %v1011 = vrot.slane %v1010, 1
    %v1012 = vadd.f32 %v1010, %v1011
    %v1013 = vsel %vm586, %v977, %v1003
    %v1014 = vsel %vm586, %v986, %v1012
    %1015 = vmatprep.subr.mxu0 %v966
    %1016 = vmatpush1.xpose.msra.mxu0 %v965
    %1017 = vmatprep.subr.mxu0 %v968
    %1018 = vmatpush1.xpose.msra.mxu0 %v967
    %1019 = vmatprep.subr.mxu0 0.0
    %1020 = vmatpush1.xpose.msra.mxu0 0.0
    %1021 = vmatprep.subr.mxu0 0.0
    %1022 = vmatpush1.xpose.msra.mxu0 0.0
    %1023 = vmatprep.subr.mxu0 0.0
    %1024 = vmatpush1.xpose.msra.mxu0 0.0
    %1025 = vmatprep.subr.mxu0 0.0
    %1026 = vmatpush1.xpose.msra.mxu0 0.0
    %1027 = vmatprep.subr.mxu0 0.0
    %1028 = vmatpush1.xpose.msra.mxu0 0.0
    %1029 = vmatprep.subr.mxu0 0.0
    %1030 = vmatpush1.xpose.msra.mxu0 0.0
    %1031 = vmatprep.subr.mxu0 0.0
    %1032 = vmatpush1.xpose.msra.mxu0 0.0
    %1033 = vmatprep.subr.mxu0 0.0
    %1034 = vmatpush1.xpose.msra.mxu0 0.0
    %1035 = vmatprep.subr.mxu0 0.0
    %1036 = vmatpush1.xpose.msra.mxu0 0.0
    %1037 = vmatprep.subr.mxu0 0.0
    %1038 = vmatpush1.xpose.msra.mxu0 0.0
    %1039 = vmatprep.subr.mxu0 0.0
    %1040 = vmatpush1.xpose.msra.mxu0 0.0
    %1041 = vmatprep.subr.mxu0 0.0
    %1042 = vmatpush1.xpose.msra.mxu0 0.0
    %1043 = vmatprep.subr.mxu0 0.0
    %1044 = vmatpush1.xpose.msra.mxu0 0.0
    %1045 = vmatprep.subr.mxu0 0.0
    %1046 = vmatpush1.xpose.msra.mxu0 0.0
    %1047 = vmatprep.subr.mxu0 0.0
    %1048 = vmatpush1.xpose.msra.mxu0 0.0
    %1049 = vmatprep.subr.mxu0 0.0
    %1050 = vmatpush1.xpose.msra.mxu0 0.0
    %1051 = vmatprep.subr.mxu0 0.0
    %1052 = vmatpush1.xpose.msra.mxu0 0.0
    %1053 = vmatprep.subr.mxu0 0.0
    %1054 = vmatpush1.xpose.msra.mxu0 0.0
    %1055 = vmatprep.subr.mxu0 0.0
    %1056 = vmatpush1.xpose.msra.mxu0 0.0
    %1057 = vmatprep.subr.mxu0 0.0
    %1058 = vmatpush1.xpose.msra.mxu0 0.0
    %1059 = vmatprep.subr.mxu0 0.0
    %1060 = vmatpush1.xpose.msra.mxu0 0.0
    %1061 = vmatprep.subr.mxu0 0.0
    %1062 = vmatpush1.xpose.msra.mxu0 0.0
    %1063 = vmatprep.subr.mxu0 0.0
    %1064 = vmatpush1.xpose.msra.mxu0 0.0
    %1065 = vmatprep.subr.mxu0 0.0
    %1066 = vmatpush1.xpose.msra.mxu0 0.0
    %1067 = vmatprep.subr.mxu0 0.0
    %1068 = vmatpush1.xpose.msra.mxu0 0.0
    %1069 = vmatprep.subr.mxu0 0.0
    %1070 = vmatpush1.xpose.msra.mxu0 0.0
    %1071 = vmatprep.subr.mxu0 0.0
    %1072 = vmatpush1.xpose.msra.mxu0 0.0
    %1073 = vmatprep.subr.mxu0 0.0
    %1074 = vmatpush1.xpose.msra.mxu0 0.0
    %1075 = vmatprep.subr.mxu0 0.0
    %1076 = vmatpush1.xpose.msra.mxu0 0.0
    %1077 = vmatprep.subr.mxu0 0.0
    %1078 = vmatpush1.xpose.msra.mxu0 0.0
    %1079 = vmatprep.mubr.f32.mxu0 %v1014
    %1080 = vmatmul.mubr.f32.gmra.mrb[0].mxu0 %v1013
    %v1081 = vpop.f32.mrb[0].mxu0
    %v1082 = vadd.f32 0.0, %v1081
    %v1083 = vpop.f32.mrb[0].mxu0
    %1084 = vdwg.mxu0
    %v1085 = vmul.f32 %v1082, 0.001953125
    %vm1086 = vcmask 130048
    %v1088 = vsel %vm1086, %v1085, 0
    %1090 = vmatprep.subr.mxu0 %v966
    %1091 = vmatpush1.msra.mxu0 %v965
    %1092 = vmatprep.subr.mxu0 %v968
    %1093 = vmatpush1.msra.mxu0 %v967
    %1094 = vmatprep.subr.mxu0 0.0
    %1095 = vmatpush1.msra.mxu0 0.0
    %1096 = vmatprep.subr.mxu0 0.0
    %1097 = vmatpush1.msra.mxu0 0.0
    %1098 = vmatprep.subr.mxu0 0.0
    %1099 = vmatpush1.msra.mxu0 0.0
    %1100 = vmatprep.subr.mxu0 0.0
    %1101 = vmatpush1.msra.mxu0 0.0
    %1102 = vmatprep.subr.mxu0 0.0
    %1103 = vmatpush1.msra.mxu0 0.0
    %1104 = vmatprep.subr.mxu0 0.0
    %1105 = vmatpush1.msra.mxu0 0.0
    %1106 = vmatprep.subr.mxu0 0.0
    %1107 = vmatpush1.msra.mxu0 0.0
    %1108 = vmatprep.subr.mxu0 0.0
    %1109 = vmatpush1.msra.mxu0 0.0
    %1110 = vmatprep.subr.mxu0 0.0
    %1111 = vmatpush1.msra.mxu0 0.0
    %1112 = vmatprep.subr.mxu0 0.0
    %1113 = vmatpush1.msra.mxu0 0.0
    %1114 = vmatprep.subr.mxu0 0.0
    %1115 = vmatpush1.msra.mxu0 0.0
    %1116 = vmatprep.subr.mxu0 0.0
    %1117 = vmatpush1.msra.mxu0 0.0
    %1118 = vmatprep.subr.mxu0 0.0
    %1119 = vmatpush1.msra.mxu0 0.0
    %1120 = vmatprep.subr.mxu0 0.0
    %1121 = vmatpush1.msra.mxu0 0.0
    %1122 = vmatprep.subr.mxu0 0.0
    %1123 = vmatpush1.msra.mxu0 0.0
    %1124 = vmatprep.subr.mxu0 0.0
    %1125 = vmatpush1.msra.mxu0 0.0
    %1126 = vmatprep.subr.mxu0 0.0
    %1127 = vmatpush1.msra.mxu0 0.0
    %1128 = vmatprep.subr.mxu0 0.0
    %1129 = vmatpush1.msra.mxu0 0.0
    %1130 = vmatprep.subr.mxu0 0.0
    %1131 = vmatpush1.msra.mxu0 0.0
    %1132 = vmatprep.subr.mxu0 0.0
    %1133 = vmatpush1.msra.mxu0 0.0
    %1134 = vmatprep.subr.mxu0 0.0
    %1135 = vmatpush1.msra.mxu0 0.0
    %1136 = vmatprep.subr.mxu0 0.0
    %1137 = vmatpush1.msra.mxu0 0.0
    %1138 = vmatprep.subr.mxu0 0.0
    %1139 = vmatpush1.msra.mxu0 0.0
    %1140 = vmatprep.subr.mxu0 0.0
    %1141 = vmatpush1.msra.mxu0 0.0
    %1142 = vmatprep.subr.mxu0 0.0
    %1143 = vmatpush1.msra.mxu0 0.0
    %1144 = vmatprep.subr.mxu0 0.0
    %1145 = vmatpush1.msra.mxu0 0.0
    %1146 = vmatprep.subr.mxu0 0.0
    %1147 = vmatpush1.msra.mxu0 0.0
    %1148 = vmatprep.subr.mxu0 0.0
    %1149 = vmatpush1.msra.mxu0 0.0
    %1150 = vmatprep.subr.mxu0 0.0
    %1151 = vmatpush1.msra.mxu0 0.0
    %1152 = vmatprep.subr.mxu0 0.0
    %1153 = vmatpush1.msra.mxu0 0.0
    %1154 = vmatprep.mubr.f32.mxu0 0.0
    %1155 = vmatmul.mubr.f32.gmra.mrb[0].mxu0 %v1088
    %v1156 = vpop.f32.mrb[0].mxu0
    %v1157 = vadd.f32 0.0, %v1156
    %v1158 = vpop.f32.mrb[0].mxu0
    %v1159 = vadd.f32 0.0, %v1158
    %1160 = vdwg.mxu0
    %v1161 = vmul.f32 %v1157, %v1157
    %v1162 = vmul.f32 %v1159, %v1159
    %v1165 = vrot.slane %v1161, 7
    %v1166 = vrot.slane %v1162, 7
    %v1169 = vsub.f32 %v1157, %v1165
    %v1170 = vsub.f32 %v1159, %v1166
    %v1171 = vadd.f32 %v1169, 1e-05
    %v1172 = vadd.f32 %v1170, 1e-05
    %v1173 = vrsqrt.pop %v1171
    %v1174 = vrsqrt.pop %v1172
    %v1177 = vcombine.low %v1173, %v1174
    %v1179 = vmul.f32 %v37, %v1177
    %v1181 = vlaneseq
    %v1182 = vshrl.u32 %v1181, 7
    %v1183 = vsub.s32 1, %v1182
    %v1184 = vrot.slane %v1179, %v1183
    %v1185 = vlaneseq
    %v1186 = vshrl.u32 %v1185, 7
    %v1187 = vsub.s32 5, %v1186
    %v1188 = vrot.slane %v1179, %v1187
    %v1191 = vmul.f32 %v1157, %v1184
    %v1192 = vmul.f32 %v1159, %v1188
    %v1195 = vcombine.low %v1191, %v1192
    %v1196 = vrot.slane %v1195, 6
    %v1198 = vsub.f32 %v37, %v1196
    %v1199 = vlaneseq
    %v1200 = vshrl.u32 %v1199, 7
    %v1201 = vsub.s32 1, %v1200
    %v1202 = vrot.slane %v1184, %v1201
    %v1203 = vlaneseq
    %v1204 = vshrl.u32 %v1203, 7
    %v1205 = vsub.s32 1, %v1204
    %v1206 = vrot.slane %v1188, %v1205
    %v1207 = vmul.f32 %v921, %v1202
    %v1208 = vmul.f32 %v923, %v1206
    %v1209 = vmul.f32 %v925, %v1202
    %v1210 = vmul.f32 %v927, %v1206
    %v1211 = vmul.f32 %v931, %v1202
    %v1212 = vmul.f32 %v933, %v1206
    %v1213 = vmul.f32 %v935, %v1202
    %v1214 = vmul.f32 %v937, %v1206
    %v1216 = vlaneseq
    %v1217 = vshrl.u32 %v1216, 7
    %v1218 = vsub.s32 2, %v1217
    %v1219 = vrot.slane %v1198, %v1218
    %v1220 = vlaneseq
    %v1221 = vshrl.u32 %v1220, 7
    %v1222 = vsub.s32 6, %v1221
    %v1223 = vrot.slane %v1198, %v1222
    %v1226 = vlaneseq
    %v1227 = vshrl.u32 %v1226, 7
    %v1228 = vsub.s32 2, %v1227
    %v1229 = vrot.slane %v1219, %v1228
    %v1230 = vlaneseq
    %v1231 = vshrl.u32 %v1230, 7
    %v1232 = vsub.s32 2, %v1231
    %v1233 = vrot.slane %v1223, %v1232
    %v1234 = vadd.f32 %v1207, %v1229
    %v1235 = vadd.f32 %v1208, %v1233
    %v1236 = vadd.f32 %v1209, %v1229
    %v1237 = vadd.f32 %v1210, %v1233
    %v1238 = vadd.f32 %v1211, %v1229
    %v1239 = vadd.f32 %v1212, %v1233
    %v1240 = vadd.f32 %v1213, %v1229
    %v1241 = vadd.f32 %v1214, %v1233
    %v1242 = vmax.f32 %v1234, 0.0
    %v1243 = vmax.f32 %v1235, 0.0
    %v1244 = vmax.f32 %v1236, 0.0
    %v1245 = vmax.f32 %v1237, 0.0
    %v1246 = vmax.f32 %v1238, 0.0
    %v1247 = vmax.f32 %v1239, 0.0
    %v1248 = vmax.f32 %v1240, 0.0
    %v1249 = vmax.f32 %v1241, 0.0
    %1250 = vst [vmem:[#allocation2] sm:$0xff] %v1242
    %1251 = vst [vmem:[#allocation2 + $0x8] sm:$0xff] %v1243
    %1252 = vst [vmem:[#allocation2 + $0x10] sm:$0xff] %v1244
    %1253 = vst [vmem:[#allocation2 + $0x18] sm:$0xff] %v1245
    %1254 = vst [vmem:[#allocation2 + $0x20] sm:$0xff] %v1246
    %1255 = vst [vmem:[#allocation2 + $0x28] sm:$0xff] %v1247
    %1256 = vst [vmem:[#allocation2 + $0x30] sm:$0xff] %v1248
    %1257 = vst [vmem:[#allocation2 + $0x38] sm:$0xff] %v1249
    // Predicated region
    $region22: #{tpu_custom_call.1} parent=1 // pred_check
      _
    $region23: #{tpu_custom_call.1} parent=1 // pred_check_branch
      %1259 = sbr.rel (0) target = $region25
    $region24: #{tpu_custom_call.1} parent=1 // pred_region
      %s1261 = ssub.s32 1024, 1024
      %1262 = vsyncadd [#allocation3], %s1261
      %s1263 = sshll.u32 [#allocation2], 4
      %s1264 = int_to_ptr.vmem [resolvable:$true] %s1263
      %1269 = dma.vmem_to_hbm [thread:$0]  %s1264, 1024, %s5, [#allocation3], 256, 256, 16
    $region25: #{tpu_custom_call.1} parent=1 // pred_fallthru
      _
    // Predicated region
    $region26: #{tpu_custom_call.1} parent=1 // pred_check
      _
    $region27: #{tpu_custom_call.1} parent=1 // pred_check_branch
      %1271 = sbr.rel (0) target = $region29
    $region28: #{tpu_custom_call.1} parent=1 // pred_region
      %1272 = dma.done [#allocation3], 1024
    $region29: #{tpu_custom_call.1} parent=1 // pred_fallthru
      _
    %1273 = vsyncpa [#allocation3], 1

</llo_original>
